<compile_context>
chip_gen: v7x
topology: tpu7x:2x2x1
jax: 0.10.0
libtpu: 0.0.40
codegen_flags: <defaults>
</compile_context>

<pallas_src>
import jax
import jax.numpy as jnp
from jax import lax
from jax.experimental import pallas as pl
from jax.experimental.pallas import tpu as pltpu


# ----------------------------------------------------------------------------
# In-kernel standard-normal generation (hardware PRNG + Acklam inverse CDF).
# Only ops with guaranteed Mosaic lowering: and/add/mul/rcp/log/sqrt/where.
# TPU-only (gated in the wrapper).
# ----------------------------------------------------------------------------
_A = (-3.969683028665376e+01, 2.209460984245205e+02, -2.759285104469687e+02,
      1.383577518672690e+02, -3.066479806614716e+01, 2.506628277459239e+00)
_B = (-5.447609879822406e+01, 1.615858368580409e+02, -1.556989798598866e+02,
      6.680131188771972e+01, -1.328068155288572e+01)
_C = (-7.784894002430293e-03, -3.223964580411365e-01, -2.400758277161838e+00,
      -2.549732539343734e+00, 4.374664141464968e+00, 2.938163982698783e+00)
_D = (7.784695709041462e-03, 3.224671290700398e-01, 2.445134137142996e+00,
      3.754408661907416e+00)
_P_LOW = 0.02425

_RAND_CHUNK = 512  # lanes per inner chunk in the randn kernel (bounds live vregs)


def _uniform_01(shape):
    """Uniform in the open interval (0, 1) from raw PRNG bits."""
    bits = pltpu.prng_random_bits(shape)
    if bits.dtype != jnp.int32:
        bits = pltpu.bitcast(bits, jnp.int32)
    u = (bits & 0x00FFFFFF).astype(jnp.float32)        # 24 random bits >= 0
    return (u + 0.5) * (1.0 / (1 << 24))


def _std_normal(shape):
    """N(0,1) via Acklam's inverse normal CDF, using p<->1-p symmetry.

    One log, one sqrt, one tail rational; divisions are approx reciprocals.
    """
    p = _uniform_01(shape)
    flip = p > 0.5
    pm = jnp.where(flip, 1.0 - p, p)                   # pm in (0, 0.5]

    # central region (pm >= P_LOW), q in (-0.5, 0]
    q = pm - 0.5
    r = q * q
    num_c = (((((_A[0] * r + _A[1]) * r + _A[2]) * r + _A[3]) * r + _A[4]) * r
             + _A[5]) * q
    den_c = ((((_B[0] * r + _B[1]) * r + _B[2]) * r + _B[3]) * r + _B[4]) * r + 1.0
    z_c = num_c * pl.reciprocal(den_c, approx=True)

    # lower tail (pm < P_LOW)
    t = jnp.sqrt(-2.0 * jnp.log(pm))
    num_t = ((((_C[0] * t + _C[1]) * t + _C[2]) * t + _C[3]) * t + _C[4]) * t + _C[5]
    den_t = (((_D[0] * t + _D[1]) * t + _D[2]) * t + _D[3]) * t + 1.0
    z_t = num_t * pl.reciprocal(den_t, approx=True)

    z = jnp.where(pm < _P_LOW, z_t, z_c)               # z <= 0 (lower half)
    return jnp.where(flip, -z, z)


# ----------------------------------------------------------------------------
# Kernels. Blocks are (Cout, TILE_HW): lane-dense stores.
# ----------------------------------------------------------------------------
def _conv_acc(acc, x, w, *, use_mxu):
    # 1x1 conv contraction over Cin.
    if use_mxu:
        # randn path is VPU/EUP-bound; the idle MXU does the contraction for free.
        return acc + jnp.dot(w, x, preferred_element_type=jnp.float32)
    # `other` path is HBM-bound; a few broadcast-FMAs on the VPU are fine.
    cin = x.shape[0]
    for c in range(cin):
        acc = acc + w[:, c:c + 1] * x[c:c + 1, :]
    return acc


def _conv_add_other_kernel(x_ref, w_ref, b_ref, other_ref, o_ref):
    # x_ref:(Cin,T)  w_ref:(Cout,Cin)  b_ref:(Cout,1)  other_ref/o_ref:(Cout,T)
    acc = b_ref[...] + other_ref[...]
    acc = _conv_acc(acc, x_ref[...], w_ref[...], use_mxu=False)
    o_ref[...] = acc.astype(o_ref.dtype)


def _conv_add_randn_kernel(seed_ref, x_ref, w_ref, b_ref, o_ref):
    n = pl.program_id(0)
    j = pl.program_id(1)
    tile_idx = n * pl.num_programs(1) + j
    # Two seed words; multiplicative hash (odd 32-bit constant) decorrelates
    # adjacent tile streams.
    pltpu.prng_seed(seed_ref[0], tile_idx * jnp.int32(-1640531527))

    cout, tile = o_ref.shape
    w = w_ref[...]
    b = b_ref[...]

    chunk = _RAND_CHUNK if (tile > _RAND_CHUNK and tile % _RAND_CHUNK == 0) else tile

    def do_chunk(off):
        acc = b + _std_normal((cout, chunk))
        acc = _conv_acc(acc, x_ref[:, pl.ds(off, chunk)], w, use_mxu=True)
        o_ref[:, pl.ds(off, chunk)] = acc.astype(o_ref.dtype)

    if chunk == tile:
        do_chunk(0)
    else:
        def body(c, carry):
            do_chunk(pl.multiple_of(c * chunk, 128))
            return carry
        lax.fori_loop(0, tile // chunk, body, 0)


# ----------------------------------------------------------------------------
# Wrapper
# ----------------------------------------------------------------------------
def _pick_tile_hw(N, HW, max_tile=8192):
    if HW <= 128:
        return HW                                   # full-extent last dim is legal
    tile = min(max_tile, 128 * (HW // 128))          # 128-aligned; ragged tail masked
    # v7x has 2 TensorCores; ensure the "parallel" grid has >= 2 steps.
    if N * pl.cdiv(HW, tile) < 2 and HW >= 256:
        tile = 128 * pl.cdiv(pl.cdiv(HW, 2), 128)
    return tile


def conv1x1_add(x_nchw, weight, bias, other_nchw=None, *, seed=0):
    """1x1 conv (stride 1) + elementwise add, fused in Pallas (NCHW in/out).

    x_nchw:     (N, Cin, H, W)  f32
    weight:     (Cout, Cin)     f32   (1x1 kernel squeezed)
    bias:       (Cout,)         f32
    other_nchw: (N, Cout, H, W) f32 or None (None -> standard normal noise)
    """
    N, Cin, H, W = x_nchw.shape
    Cout = weight.shape[0]
    HW = H * W

    # TPU hardware PRNG only lowers on real TPUs; on other backends (e.g. the
    # CPU interpret fallback) generate the noise with jax.random instead.
    in_kernel_rng = (other_nchw is None) and (jax.default_backend() == "tpu")
    if other_nchw is None and not in_kernel_rng:
        other_nchw = jax.random.normal(
            jax.random.PRNGKey(seed), (N, Cout, H, W), dtype=x_nchw.dtype)

    tile_hw = _pick_tile_hw(N, HW)
    grid = (N, pl.cdiv(HW, tile_hw))

    x_flat = x_nchw.reshape(N, Cin, HW)               # pure reshape, no pad/transpose
    w = weight.astype(jnp.float32)                    # (Cout, Cin)
    b = bias.reshape(Cout, 1).astype(jnp.float32)     # (Cout, 1)

    x_spec = pl.BlockSpec((pl.Squeezed(), Cin, tile_hw), lambda n, j, *_: (n, 0, j))
    w_spec = pl.BlockSpec((Cout, Cin), lambda n, j, *_: (0, 0))
    b_spec = pl.BlockSpec((Cout, 1), lambda n, j, *_: (0, 0))
    o_spec = pl.BlockSpec((pl.Squeezed(), Cout, tile_hw), lambda n, j, *_: (n, 0, j))

    out_shape = jax.ShapeDtypeStruct((N, Cout, HW), x_nchw.dtype)
    cparams = pltpu.CompilerParams(dimension_semantics=("parallel", "parallel"))

    if in_kernel_rng:
        seed_arr = jnp.asarray([seed], dtype=jnp.int32)
        out_flat = pl.pallas_call(
            _conv_add_randn_kernel,
            out_shape=out_shape,
            grid_spec=pltpu.PrefetchScalarGridSpec(
                num_scalar_prefetch=1,
                grid=grid,
                in_specs=[x_spec, w_spec, b_spec],
                out_specs=o_spec),
            compiler_params=cparams,
        )(seed_arr, x_flat, w, b)
    else:
        other_flat = other_nchw.reshape(N, Cout, HW)
        other_spec = pl.BlockSpec((pl.Squeezed(), Cout, tile_hw),
                                  lambda n, j, *_: (n, 0, j))
        out_flat = pl.pallas_call(
            _conv_add_other_kernel,
            out_shape=out_shape,
            grid_spec=pltpu.PrefetchScalarGridSpec(
                num_scalar_prefetch=0,
                grid=grid,
                in_specs=[x_spec, w_spec, b_spec, other_spec],
                out_specs=o_spec),
            compiler_params=cparams,
        )(x_flat, w, b, other_flat)

    return out_flat.reshape(N, Cout, H, W)


class ModelPallas:
    """Mirror of the PyTorch Model (1x1 conv, then + other / + randn)."""

    def __init__(self, key, in_ch=4, out_ch=16):
        kw, kb = jax.random.split(key)
        fan_in = in_ch  # 1x1 kernel
        bound = 1.0 / (fan_in ** 0.5)
        self.weight = jax.random.uniform(
            kw, (out_ch, in_ch), jnp.float32, -bound, bound)
        self.bias = jax.random.uniform(
            kb, (out_ch,), jnp.float32, -bound, bound)
        self.out_ch = out_ch

    def __call__(self, x1, other=None, padding1=None, *, seed=0):
        # TODO(synk): noise is distributionally equivalent to torch.randn, not
        # bit-identical to any torch RNG stream.
        return conv1x1_add(x1, self.weight, self.bias, other, seed=seed)


if __name__ == "__main__":
    key = jax.random.PRNGKey(0)
    k_param, k_x, k_other = jax.random.split(key, 3)

    # Small NCHW shapes consistent with the module.
    x1 = jax.random.normal(k_x, (2, 4, 16, 16), dtype=jnp.float32)
    model = ModelPallas(k_param, in_ch=4, out_ch=16)

    # Plain-JAX conv reference (exact f32).
    conv_ref = jnp.einsum("nchw,oc->nohw", x1, model.weight,
                          precision=jax.lax.Precision.HIGHEST)
    conv_ref = conv_ref + model.bias[None, :, None, None]

    # 1) Deterministic path: `other` provided -> exact check vs reference.
    other = jax.random.normal(k_other, (2, 16, 16, 16), dtype=jnp.float32)
    out_det = jax.block_until_ready(model(x1, other=other))
    assert out_det.shape == (2, 16, 16, 16)
    assert jnp.allclose(out_det, conv_ref + other, atol=1e-5, rtol=1e-5)

    # 2) Module-default path: other=None -> conv + standard-normal noise
    #    (in-kernel hardware PRNG on TPU, jax.random fallback elsewhere).
    out = jax.block_until_ready(model(x1, other=None, seed=1234))
    assert out.shape == (2, 16, 16, 16)
    assert bool(jnp.all(jnp.isfinite(out)))
    noise = out - conv_ref                     # recovered additive noise
    assert abs(float(noise.mean())) < 0.2      # loose distributional sanity
    assert 0.7 < float(noise.std()) < 1.3

    print("KERNEL_OK")
</pallas_src>

<mosaic_0001>
module attributes {stable_mosaic.version = 11 : i64} {
  func.func @_conv_add_other_kernel(%arg0: i32, %arg1: i32, %arg2: memref<1x4x256xf32, #tpu.memory_space<vmem>>, %arg3: memref<16x4xf32, #tpu.memory_space<vmem>>, %arg4: memref<16x1xf32, #tpu.memory_space<vmem>>, %arg5: memref<1x16x256xf32, #tpu.memory_space<vmem>>, %arg6: memref<1x16x256xf32, #tpu.memory_space<vmem>>) attributes {dimension_semantics = [#tpu.dimension_semantics<parallel>, #tpu.dimension_semantics<parallel>], iteration_bounds = array<i64: 2, 1>, scalar_prefetch = 0 : i64, scratch_operands = 0 : i64, tpu.core_type = #tpu.core_type<tc>, window_params = [{transform_indices = @transform_0, window_bounds = array<i64: 1, 4, 256>}, {pipeline_mode = #tpu.pipeline_mode<synchronous>, transform_indices = @transform_1, window_bounds = array<i64: 16, 4>}, {pipeline_mode = #tpu.pipeline_mode<synchronous>, transform_indices = @transform_2, window_bounds = array<i64: 16, 1>}, {transform_indices = @transform_3, window_bounds = array<i64: 1, 16, 256>}, {transform_indices = @transform_4, window_bounds = array<i64: 1, 16, 256>}]} {
    %c0 = arith.constant 0 : index
    %c0_0 = arith.constant 0 : index
    %0 = vector.load %arg4[%c0, %c0_0] : memref<16x1xf32, #tpu.memory_space<vmem>>, vector<16x1xf32>
    %c0_1 = arith.constant 0 : index
    %c0_2 = arith.constant 0 : index
    %c0_3 = arith.constant 0 : index
    %1 = vector.load %arg5[%c0_1, %c0_2, %c0_3] : memref<1x16x256xf32, #tpu.memory_space<vmem>>, vector<1x16x256xf32>
    %2 = vector.shape_cast %1 : vector<1x16x256xf32> to vector<16x256xf32>
    %3 = vector.broadcast %0 : vector<16x1xf32> to vector<16x256xf32>
    %4 = arith.addf %3, %2 : vector<16x256xf32>
    %c0_4 = arith.constant 0 : index
    %c0_5 = arith.constant 0 : index
    %c0_6 = arith.constant 0 : index
    %5 = vector.load %arg2[%c0_4, %c0_5, %c0_6] : memref<1x4x256xf32, #tpu.memory_space<vmem>>, vector<1x4x256xf32>
    %6 = vector.shape_cast %5 : vector<1x4x256xf32> to vector<4x256xf32>
    %c0_7 = arith.constant 0 : index
    %c0_8 = arith.constant 0 : index
    %7 = vector.load %arg3[%c0_7, %c0_8] : memref<16x4xf32, #tpu.memory_space<vmem>>, vector<16x4xf32>
    %8 = vector.extract_strided_slice %7 {offsets = [0, 0], sizes = [16, 1], strides = [1, 1]} : vector<16x4xf32> to vector<16x1xf32>
    %9 = vector.extract_strided_slice %6 {offsets = [0, 0], sizes = [1, 256], strides = [1, 1]} : vector<4x256xf32> to vector<1x256xf32>
    %10 = vector.broadcast %8 : vector<16x1xf32> to vector<16x256xf32>
    %11 = vector.broadcast %9 : vector<1x256xf32> to vector<16x256xf32>
    %12 = arith.mulf %10, %11 : vector<16x256xf32>
    %13 = arith.addf %4, %12 : vector<16x256xf32>
    %14 = vector.extract_strided_slice %7 {offsets = [0, 1], sizes = [16, 1], strides = [1, 1]} : vector<16x4xf32> to vector<16x1xf32>
    %15 = vector.extract_strided_slice %6 {offsets = [1, 0], sizes = [1, 256], strides = [1, 1]} : vector<4x256xf32> to vector<1x256xf32>
    %16 = vector.broadcast %14 : vector<16x1xf32> to vector<16x256xf32>
    %17 = vector.broadcast %15 : vector<1x256xf32> to vector<16x256xf32>
    %18 = arith.mulf %16, %17 : vector<16x256xf32>
    %19 = arith.addf %13, %18 : vector<16x256xf32>
    %20 = vector.extract_strided_slice %7 {offsets = [0, 2], sizes = [16, 1], strides = [1, 1]} : vector<16x4xf32> to vector<16x1xf32>
    %21 = vector.extract_strided_slice %6 {offsets = [2, 0], sizes = [1, 256], strides = [1, 1]} : vector<4x256xf32> to vector<1x256xf32>
    %22 = vector.broadcast %20 : vector<16x1xf32> to vector<16x256xf32>
    %23 = vector.broadcast %21 : vector<1x256xf32> to vector<16x256xf32>
    %24 = arith.mulf %22, %23 : vector<16x256xf32>
    %25 = arith.addf %19, %24 : vector<16x256xf32>
    %26 = vector.extract_strided_slice %7 {offsets = [0, 3], sizes = [16, 1], strides = [1, 1]} : vector<16x4xf32> to vector<16x1xf32>
    %27 = vector.extract_strided_slice %6 {offsets = [3, 0], sizes = [1, 256], strides = [1, 1]} : vector<4x256xf32> to vector<1x256xf32>
    %28 = vector.broadcast %26 : vector<16x1xf32> to vector<16x256xf32>
    %29 = vector.broadcast %27 : vector<1x256xf32> to vector<16x256xf32>
    %30 = arith.mulf %28, %29 : vector<16x256xf32>
    %31 = arith.addf %25, %30 : vector<16x256xf32>
    %c0_9 = arith.constant 0 : index
    %c0_10 = arith.constant 0 : index
    %c0_11 = arith.constant 0 : index
    %32 = vector.load %arg6[%c0_9, %c0_10, %c0_11] : memref<1x16x256xf32, #tpu.memory_space<vmem>>, vector<1x16x256xf32>
    %33 = vector.shape_cast %32 : vector<1x16x256xf32> to vector<16x256xf32>
    %34 = vector.shape_cast %31 : vector<16x256xf32> to vector<1x16x256xf32>
    tpu.vector_store %arg6[%c0_9, %c0_10, %c0_11], %34 {strides = array<i32>} : memref<1x16x256xf32, #tpu.memory_space<vmem>>, vector<1x16x256xf32>,
    return
  }
  func.func @transform_0(%arg0: i32, %arg1: i32) -> (i32, i32, i32) {
    %c0_i32 = arith.constant 0 : i32
    %c0_i32_0 = arith.constant 0 : i32
    return %arg0, %c0_i32, %arg1 : i32, i32, i32
  }
  func.func @transform_1(%arg0: i32, %arg1: i32) -> (i32, i32) {
    %c0_i32 = arith.constant 0 : i32
    %c0_i32_0 = arith.constant 0 : i32
    %c0_i32_1 = arith.constant 0 : i32
    return %c0_i32, %c0_i32_0 : i32, i32
  }
  func.func @transform_2(%arg0: i32, %arg1: i32) -> (i32, i32) {
    %c0_i32 = arith.constant 0 : i32
    %c0_i32_0 = arith.constant 0 : i32
    %c0_i32_1 = arith.constant 0 : i32
    return %c0_i32, %c0_i32_0 : i32, i32
  }
  func.func @transform_3(%arg0: i32, %arg1: i32) -> (i32, i32, i32) {
    %c0_i32 = arith.constant 0 : i32
    %c0_i32_0 = arith.constant 0 : i32
    return %arg0, %c0_i32, %arg1 : i32, i32, i32
  }
  func.func @transform_4(%arg0: i32, %arg1: i32) -> (i32, i32, i32) {
    %c0_i32 = arith.constant 0 : i32
    %c0_i32_0 = arith.constant 0 : i32
    return %arg0, %c0_i32, %arg1 : i32, i32, i32
  }
}

</mosaic_0001>

<llo_original>
// kernel: tpu_custom_call.1
$region0: #{tpu_custom_call.1}
  #allocation0 [shape = 'u32[]', space=smem, size = 0x4, offset = 0x4, fixed_abs, tag = 'smem constant byte address 0x4 - core index']
  #allocation1 [shape = 'u32[144,128]{1,0:T(1,128)}', space=vmem, size = 0x12000, scoped, tag = 'internal scratch']
  %s0 = inlined_call_operand.vmem [shape: f32[2,4,256], index: 0, kind: input, shape index: {}]
  %s1 = inlined_call_operand.vmem [shape: f32[16,4], index: 1, kind: input, shape index: {}]
  %s2 = inlined_call_operand.vmem [shape: f32[16,1], index: 2, kind: input, shape index: {}]
  %s3 = inlined_call_operand.hbm [shape: f32[2,16,256], index: 3, kind: input, shape index: {}]
  %s4 = inlined_call_operand.hbm [shape: f32[2,16,256], index: 4, kind: output, shape index: {}]
  %s5 = sld [smem:[#allocation0]]
  $region53: #{tpu_custom_call.1} parent=0
    _
  %s7 = ssub.s32 1, %s5
  %s8 = scalar_select 0, %s7, %s5
  $region1: #{tpu_custom_call.1} parent=0
    #allocation2 [shape = 'u8[32768]{0}', space=vmem, size = 0x8000, scoped, tag = 'input window, operand 3']
    #allocation3 [shape = 's32[2]{0}', space=sflag, size = 0x8, scoped, tag = 'scoped memory for tpu_custom_call.1']
    #allocation4 [shape = 's32[2]{0}', space=sflag, size = 0x8, scoped, tag = 'scoped memory for tpu_custom_call.1']
    #allocation5 [shape = 'u8[32768]{0}', space=vmem, size = 0x8000, scoped, tag = 'output window, operand 0']
    %9 = vsyncpa [#allocation3], 0
    %s10 = scalar_lea.sflag [#allocation3], 1
    %11 = vsyncpa %s10, 0
    %12 = vsyncpa [#allocation4], 0
    %s13 = scalar_lea.sflag [#allocation4], 1
    %14 = vsyncpa %s13, 0
    loop: start=0, step=1, limit=4
    $region2: #{tpu_custom_call.1} parent=1 // loop_pre_header
      _
    $region3: #{tpu_custom_call.1} parent=1 // loop_header
      %s16 = sphi 0, %s20
      %p17 = scmp.ge.s32.totalorder %s16, 4
      %s23 = sphi 0, %s35
      %s24 = sphi 0, %s31
      %s25 = sphi 0, %s23
      %s26 = sphi 0, %s24
      %s27 = sphi 0, %s25
      %s28 = sphi 0, %s26
      %s40 = sphi 0, %s42
      %s43 = sphi 0, %s40
      %s44 = sphi 0, %s43
      %s60 = sphi 0, %s44
      %s64 = sphi 0, %s64
      %s66 = sphi 0, %s64
      %s67 = sphi 0, %s66
      %s81 = sphi 0, %s67
      %s85 = sphi 0, %s85
      %s87 = sphi 0, %s85
      %s88 = sphi 0, %s87
      %s102 = sphi 0, %s88
      %s110 = sphi 0, %s112
      %s113 = sphi 0, %s110
      %s114 = sphi 0, %s113
      %s130 = sphi 0, %s114
      %s138 = sphi 0, %s140
      %s141 = sphi 0, %s138
      %s142 = sphi 0, %s141
      %s158 = sphi 0, %s142
    $region4: #{tpu_custom_call.1} parent=1 // loop_header_branch
      %19 = sbr.rel (%p17) target = $region8
    $region5: #{tpu_custom_call.1} parent=1 // loop_body
      %s21 = ssub.s32 %s16, 1
      %s22 = ssub.s32 %s16, 2
      %s29 = sadd.s32 1, %s24
      %p30 = scmp.ge.s32.totalorder %s29, 1
      %s31 = scalar_select %p30, 0, %s29
      %s32 = sadd.s32 1, %s23
      %s33 = scalar_select %p30, %s32, %s23
      %p34 = scmp.ge.s32.totalorder %s33, 2
      %s35 = scalar_select %p34, 0, %s33
      %s36 = ssub.s32 %s23, %s35
      %s37 = ssub.s32 %s24, %s31
      %s38 = sor.u32 %s36, %s37
      %p39 = scmp.eq.s32.totalorder %s38, 0
      %s41 = sadd.s32 %s40, 1
      %s42 = scalar_select %p39, %s40, %s41
      %p45 = pneg %p39
      %p46 = scmp.eq.s32.totalorder %s16, 1
      %p47 = por %p45, %p46
      %p48 = scmp.ne.s32.totalorder %s40, %s43
      %p49 = scmp.eq.s32.totalorder %s16, 0
      %p50 = por %p48, %p49
      %p51 = scmp.ne.s32.totalorder %s40, %s43
      %p52 = scmp.eq.s32.totalorder %s21, 1
      %p53 = por %p51, %p52
      %p54 = scmp.ne.s32.totalorder %s43, %s44
      %p55 = scmp.eq.s32.totalorder %s21, 0
      %p56 = por %p54, %p55
      %p57 = scmp.ne.s32.totalorder %s43, %s44
      %p58 = scmp.eq.s32.totalorder %s22, 1
      %p59 = por %p57, %p58
      %p61 = scmp.ne.s32.totalorder %s44, %s60
      %p62 = scmp.eq.s32.totalorder %s22, 0
      %p63 = por %p61, %p62
      %s65 = sadd.s32 %s64, 1
      %p68 = scmp.eq.s32.totalorder %s16, 1
      %p69 = scmp.ne.s32.totalorder %s64, %s66
      %p70 = scmp.eq.s32.totalorder %s16, 0
      %p71 = por %p69, %p70
      %p72 = scmp.ne.s32.totalorder %s64, %s66
      %p73 = scmp.eq.s32.totalorder %s21, 1
      %p74 = por %p72, %p73
      %p75 = scmp.ne.s32.totalorder %s66, %s67
      %p76 = scmp.eq.s32.totalorder %s21, 0
      %p77 = por %p75, %p76
      %p78 = scmp.ne.s32.totalorder %s66, %s67
      %p79 = scmp.eq.s32.totalorder %s22, 1
      %p80 = por %p78, %p79
      %p82 = scmp.ne.s32.totalorder %s67, %s81
      %p83 = scmp.eq.s32.totalorder %s22, 0
      %p84 = por %p82, %p83
      %s86 = sadd.s32 %s85, 1
      %p89 = scmp.eq.s32.totalorder %s16, 1
      %p90 = scmp.ne.s32.totalorder %s85, %s87
      %p91 = scmp.eq.s32.totalorder %s16, 0
      %p92 = por %p90, %p91
      %p93 = scmp.ne.s32.totalorder %s85, %s87
      %p94 = scmp.eq.s32.totalorder %s21, 1
      %p95 = por %p93, %p94
      %p96 = scmp.ne.s32.totalorder %s87, %s88
      %p97 = scmp.eq.s32.totalorder %s21, 0
      %p98 = por %p96, %p97
      %p99 = scmp.ne.s32.totalorder %s87, %s88
      %p100 = scmp.eq.s32.totalorder %s22, 1
      %p101 = por %p99, %p100
      %p103 = scmp.ne.s32.totalorder %s88, %s102
      %p104 = scmp.eq.s32.totalorder %s22, 0
      %p105 = por %p103, %p104
      %s106 = ssub.s32 %s23, %s35
      %s107 = ssub.s32 %s24, %s31
      %s108 = sor.u32 %s106, %s107
      %p109 = scmp.eq.s32.totalorder %s108, 0
      %s111 = sadd.s32 %s110, 1
      %s112 = scalar_select %p109, %s110, %s111
      %p115 = pneg %p109
      %p116 = scmp.eq.s32.totalorder %s16, 1
      %p117 = por %p115, %p116
      %p118 = scmp.ne.s32.totalorder %s110, %s113
      %p119 = scmp.eq.s32.totalorder %s16, 0
      %p120 = por %p118, %p119
      %p121 = scmp.ne.s32.totalorder %s110, %s113
      %p122 = scmp.eq.s32.totalorder %s21, 1
      %p123 = por %p121, %p122
      %p124 = scmp.ne.s32.totalorder %s113, %s114
      %p125 = scmp.eq.s32.totalorder %s21, 0
      %p126 = por %p124, %p125
      %p127 = scmp.ne.s32.totalorder %s113, %s114
      %p128 = scmp.eq.s32.totalorder %s22, 1
      %p129 = por %p127, %p128
      %p131 = scmp.ne.s32.totalorder %s114, %s130
      %p132 = scmp.eq.s32.totalorder %s22, 0
      %p133 = por %p131, %p132
      %s134 = ssub.s32 %s23, %s35
      %s135 = ssub.s32 %s24, %s31
      %s136 = sor.u32 %s134, %s135
      %p137 = scmp.eq.s32.totalorder %s136, 0
      %s139 = sadd.s32 %s138, 1
      %s140 = scalar_select %p137, %s138, %s139
      %p143 = pneg %p137
      %p144 = scmp.eq.s32.totalorder %s16, 1
      %p145 = por %p143, %p144
      %p146 = scmp.ne.s32.totalorder %s138, %s141
      %p147 = scmp.eq.s32.totalorder %s16, 0
      %p148 = por %p146, %p147
      %p149 = scmp.ne.s32.totalorder %s138, %s141
      %p150 = scmp.eq.s32.totalorder %s21, 1
      %p151 = por %p149, %p150
      %p152 = scmp.ne.s32.totalorder %s141, %s142
      %p153 = scmp.eq.s32.totalorder %s21, 0
      %p154 = por %p152, %p153
      %p155 = scmp.ne.s32.totalorder %s141, %s142
      %p156 = scmp.eq.s32.totalorder %s22, 1
      %p157 = por %p155, %p156
      %p159 = scmp.ne.s32.totalorder %s142, %s158
      %p160 = scmp.eq.s32.totalorder %s22, 0
      %p161 = por %p159, %p160
      %p162 = scmp.le.s32.totalorder 1, %s16
      %p163 = scmp.lt.s32.totalorder %s16, 3
      %p164 = pnand %p162, %p163
      %p165 = pneg %p164
      // Predicated region
      $region9: #{tpu_custom_call.1} parent=5 // pred_check
        _
      $region10: #{tpu_custom_call.1} parent=5 // pred_check_branch
        %167 = sbr.rel (%p164) target = $region12
      $region11: #{tpu_custom_call.1} parent=5 // pred_region
        %s168 = ssub.s32 %s16, 1
        // Predicated region
        $region13: #{tpu_custom_call.1} parent=11 // pred_check
          %p169 = pneg %p77
        $region14: #{tpu_custom_call.1} parent=11 // pred_check_branch
          %171 = sbr.rel (%p169) target = $region16
        $region15: #{tpu_custom_call.1} parent=11 // pred_region
          _
        $region16: #{tpu_custom_call.1} parent=11 // pred_fallthru
          _
        // Predicated region
        $region17: #{tpu_custom_call.1} parent=11 // pred_check
          %p172 = pneg %p98
        $region18: #{tpu_custom_call.1} parent=11 // pred_check_branch
          %174 = sbr.rel (%p172) target = $region20
        $region19: #{tpu_custom_call.1} parent=11 // pred_region
          _
        $region20: #{tpu_custom_call.1} parent=11 // pred_fallthru
          _
      $region12: #{tpu_custom_call.1} parent=5 // pred_fallthru
        _
      %p175 = scmp.lt.s32.totalorder %s16, 2
      // Predicated region
      $region21: #{tpu_custom_call.1} parent=5 // pred_check
        %p176 = pneg %p175
      $region22: #{tpu_custom_call.1} parent=5 // pred_check_branch
        %178 = sbr.rel (%p176) target = $region24
      $region23: #{tpu_custom_call.1} parent=5 // pred_region
        // Predicated region
        $region25: #{tpu_custom_call.1} parent=23 // pred_check
          %p179 = pneg %p50
        $region26: #{tpu_custom_call.1} parent=23 // pred_check_branch
          %181 = sbr.rel (%p179) target = $region28
        $region27: #{tpu_custom_call.1} parent=23 // pred_region
          %s182 = smul.u32 2, %s24
          %p183 = scmp.lt.s32.totalorder %s23, 1
          %s184 = scalar_select %p183, %s23, 1
          %p185 = scmp.lt.s32.totalorder %s182, 1
          %s186 = scalar_select %p185, %s182, 1
          %s187 = smul.addr %s184, 2
          %s188 = sadd.s32 %s186, %s187
          %s189 = smul.addr %s188, 4
          %s190 = scalar_lea.vmem %s0, %s189
          %s191 = smul.u32 2, %s24
        $region28: #{tpu_custom_call.1} parent=23 // pred_fallthru
          _
        // Predicated region
        $region29: #{tpu_custom_call.1} parent=23 // pred_check
          %p192 = pneg %p120
        $region30: #{tpu_custom_call.1} parent=23 // pred_check_branch
          %194 = sbr.rel (%p192) target = $region32
        $region31: #{tpu_custom_call.1} parent=23 // pred_region
          %s195 = sand.u32 %s110, 1
          %s196 = scalar_lea.sflag [#allocation3], %s195
          %s197 = sand.u32 %s110, 1
          %s198 = smul.addr %s197, 32
          %s199 = scalar_lea.vmem [#allocation2], %s198
          %s200 = smul.u32 2, %s24
          %s202 = ssub.s32 512, 512
          %203 = vsyncadd %s196, %s202
          %s204 = smul.addr %s23, 4
          %s205 = sadd.s32 %s200, %s204
          %s206 = smul.addr %s205, 128
          %s207 = scalar_lea.hbm %s3, %s206
          %s208 = sshll.u32 %s199, 4
          %s209 = int_to_ptr.vmem [resolvable:$true] %s208
          %214 = dma.hbm_to_vmem [thread:$0]  %s207, 512, %s209, %s196, 256, 256, 16
        $region32: #{tpu_custom_call.1} parent=23 // pred_fallthru
          _
      $region24: #{tpu_custom_call.1} parent=5 // pred_fallthru
        _
      %p215 = scmp.le.s32.totalorder 1, %s16
      %p216 = scmp.lt.s32.totalorder %s16, 3
      %p217 = pnand %p215, %p216
      %p218 = pneg %p217
      // Predicated region
      $region33: #{tpu_custom_call.1} parent=5 // pred_check
        _
      $region34: #{tpu_custom_call.1} parent=5 // pred_check_branch
        %220 = sbr.rel (%p217) target = $region36
      $region35: #{tpu_custom_call.1} parent=5 // pred_region
        %s221 = ssub.s32 %s16, 1
        %s222 = sand.u32 %s113, 1
        %s223 = scalar_lea.sflag [#allocation3], %s222
        %s224 = sand.u32 %s113, 1
        %s225 = smul.addr %s224, 32
        %s226 = scalar_lea.vmem [#allocation2], %s225
        // Predicated region
        $region37: #{tpu_custom_call.1} parent=35 // pred_check
          %p227 = pneg %p126
        $region38: #{tpu_custom_call.1} parent=35 // pred_check_branch
          %229 = sbr.rel (%p227) target = $region40
        $region39: #{tpu_custom_call.1} parent=35 // pred_region
          %230 = dma.done %s223, 512
        $region40: #{tpu_custom_call.1} parent=35 // pred_fallthru
          _
        %s231 = smul.u32 2, %s26
        %p232 = scmp.lt.s32.totalorder %s25, 1
        %s233 = scalar_select %p232, %s25, 1
        %p234 = scmp.lt.s32.totalorder %s231, 1
        %s235 = scalar_select %p234, %s231, 1
        %s236 = smul.addr %s233, 2
        %s237 = sadd.s32 %s235, %s236
        %s238 = smul.addr %s237, 4
        %s239 = scalar_lea.vmem %s0, %s238
        %p240 = pneg %p56
        %p241 = pneg %p53
        %p242 = pneg %p77
        %p243 = pneg %p74
        %p244 = pneg %p98
        %p245 = pneg %p95
        %s246 = sand.u32 %s113, 1
        %s247 = scalar_lea.sflag [#allocation3], %s246
        %s248 = sand.u32 %s113, 1
        %s249 = smul.addr %s248, 32
        %s250 = scalar_lea.vmem [#allocation2], %s249
        %p251 = pneg %p126
        %p252 = pneg %p123
        %p253 = pneg %p154
        %p254 = pneg %p151
        %s255 = sand.u32 %s141, 1
        %s256 = scalar_lea.sflag [#allocation4], %s255
        %s257 = sand.u32 %s141, 1
        %s258 = smul.addr %s257, 32
        %s259 = scalar_lea.vmem [#allocation5], %s258
        %s260 = smul.u32 2, %s26
        %p261 = scmp.lt.s32.totalorder %s25, 1
        %s262 = scalar_select %p261, %s25, 1
        %p263 = scmp.lt.s32.totalorder %s260, 1
        %s264 = scalar_select %p263, %s260, 1
        %s265 = smul.addr %s262, 2
        %s266 = sadd.s32 %s264, %s265
        %s267 = smul.addr %s266, 4
        %s268 = scalar_lea.vmem %s0, %s267
        %s269 = smul.u32 2, %s26
        %s270 = smul.u32 2, %s26
        %s271 = smul.u32 2, %s26
        %v272 = vld [vmem:[%s2] sm:$0xff]
        %v273 = vld [vmem:[%s2 + $0x8] sm:$0xff]
        %v274 = vld [vmem:[%s226] sm:$0xff]
        %v275 = vld [vmem:[%s226 + $0x8] sm:$0xff]
        %v276 = vld [vmem:[%s226 + $0x10] sm:$0xff]
        %v277 = vld [vmem:[%s226 + $0x18] sm:$0xff]
        %279 = vset.pattern.permute.xlu0 0
        %280 = vperm.xlu0 %279, %v272
        %v281 = vpop.permute.xlu0 %280
        %284 = vset.pattern.permute.xlu0 0
        %285 = vperm.xlu0 %284, %v273
        %v286 = vpop.permute.xlu0 %285
        %v288 = vadd.f32 %v281, %v274
        %v289 = vadd.f32 %v281, %v275
        %v290 = vadd.f32 %v286, %v276
        %v291 = vadd.f32 %v286, %v277
        %v292 = vld [vmem:[%s268] sm:$0xff]
        %v293 = vld [vmem:[%s1] sm:$0xff]
        %v294 = vld [vmem:[%s1 + $0x8] sm:$0xff]
        %296 = vset.pattern.permute.xlu0 0
        %297 = vperm.xlu0 %296, %v293
        %v298 = vpop.permute.xlu0 %297
        %301 = vset.pattern.permute.xlu0 0
        %302 = vperm.xlu0 %301, %v294
        %v303 = vpop.permute.xlu0 %302
        %v306 = vlaneseq
        %v307 = vshrl.u32 %v306, 7
        %v308 = vsub.s32 0, %v307
        %v309 = vrot.slane %v292, %v308
        %v310 = vlaneseq
        %v311 = vshrl.u32 %v310, 7
        %v312 = vsub.s32 4, %v311
        %v313 = vrot.slane %v292, %v312
        %v316 = vlaneseq
        %v317 = vshrl.u32 %v316, 7
        %v318 = vsub.s32 0, %v317
        %v319 = vrot.slane %v309, %v318
        %v320 = vlaneseq
        %v321 = vshrl.u32 %v320, 7
        %v322 = vsub.s32 0, %v321
        %v323 = vrot.slane %v313, %v322
        %v324 = vmul.f32 %v298, %v319
        %v325 = vmul.f32 %v298, %v323
        %v326 = vmul.f32 %v303, %v319
        %v327 = vmul.f32 %v303, %v323
        %v328 = vadd.f32 %v288, %v324
        %v329 = vadd.f32 %v289, %v325
        %v330 = vadd.f32 %v290, %v326
        %v331 = vadd.f32 %v291, %v327
        %332 = vset.pattern.permute.xlu0 1
        %333 = vperm.xlu0 %332, %v293
        %v334 = vpop.permute.xlu0 %333
        %336 = vset.pattern.permute.xlu0 1
        %337 = vperm.xlu0 %336, %v294
        %v338 = vpop.permute.xlu0 %337
        %v340 = vlaneseq
        %v341 = vshrl.u32 %v340, 7
        %v342 = vsub.s32 1, %v341
        %v343 = vrot.slane %v292, %v342
        %v344 = vlaneseq
        %v345 = vshrl.u32 %v344, 7
        %v346 = vsub.s32 5, %v345
        %v347 = vrot.slane %v292, %v346
        %v350 = vlaneseq
        %v351 = vshrl.u32 %v350, 7
        %v352 = vsub.s32 1, %v351
        %v353 = vrot.slane %v343, %v352
        %v354 = vlaneseq
        %v355 = vshrl.u32 %v354, 7
        %v356 = vsub.s32 1, %v355
        %v357 = vrot.slane %v347, %v356
        %v358 = vmul.f32 %v334, %v353
        %v359 = vmul.f32 %v334, %v357
        %v360 = vmul.f32 %v338, %v353
        %v361 = vmul.f32 %v338, %v357
        %v362 = vadd.f32 %v328, %v358
        %v363 = vadd.f32 %v329, %v359
        %v364 = vadd.f32 %v330, %v360
        %v365 = vadd.f32 %v331, %v361
        %366 = vset.pattern.permute.xlu0 2
        %367 = vperm.xlu0 %366, %v293
        %v368 = vpop.permute.xlu0 %367
        %370 = vset.pattern.permute.xlu0 2
        %371 = vperm.xlu0 %370, %v294
        %v372 = vpop.permute.xlu0 %371
        %v374 = vlaneseq
        %v375 = vshrl.u32 %v374, 7
        %v376 = vsub.s32 2, %v375
        %v377 = vrot.slane %v292, %v376
        %v378 = vlaneseq
        %v379 = vshrl.u32 %v378, 7
        %v380 = vsub.s32 6, %v379
        %v381 = vrot.slane %v292, %v380
        %v384 = vlaneseq
        %v385 = vshrl.u32 %v384, 7
        %v386 = vsub.s32 2, %v385
        %v387 = vrot.slane %v377, %v386
        %v388 = vlaneseq
        %v389 = vshrl.u32 %v388, 7
        %v390 = vsub.s32 2, %v389
        %v391 = vrot.slane %v381, %v390
        %v392 = vmul.f32 %v368, %v387
        %v393 = vmul.f32 %v368, %v391
        %v394 = vmul.f32 %v372, %v387
        %v395 = vmul.f32 %v372, %v391
        %v396 = vadd.f32 %v362, %v392
        %v397 = vadd.f32 %v363, %v393
        %v398 = vadd.f32 %v364, %v394
        %v399 = vadd.f32 %v365, %v395
        %400 = vset.pattern.permute.xlu0 3
        %401 = vperm.xlu0 %400, %v293
        %v402 = vpop.permute.xlu0 %401
        %404 = vset.pattern.permute.xlu0 3
        %405 = vperm.xlu0 %404, %v294
        %v406 = vpop.permute.xlu0 %405
        %v408 = vlaneseq
        %v409 = vshrl.u32 %v408, 7
        %v410 = vsub.s32 3, %v409
        %v411 = vrot.slane %v292, %v410
        %v412 = vlaneseq
        %v413 = vshrl.u32 %v412, 7
        %v414 = vsub.s32 7, %v413
        %v415 = vrot.slane %v292, %v414
        %v418 = vlaneseq
        %v419 = vshrl.u32 %v418, 7
        %v420 = vsub.s32 3, %v419
        %v421 = vrot.slane %v411, %v420
        %v422 = vlaneseq
        %v423 = vshrl.u32 %v422, 7
        %v424 = vsub.s32 3, %v423
        %v425 = vrot.slane %v415, %v424
        %v426 = vmul.f32 %v402, %v421
        %v427 = vmul.f32 %v402, %v425
        %v428 = vmul.f32 %v406, %v421
        %v429 = vmul.f32 %v406, %v425
        %v430 = vadd.f32 %v396, %v426
        %v431 = vadd.f32 %v397, %v427
        %v432 = vadd.f32 %v398, %v428
        %v433 = vadd.f32 %v399, %v429
        %434 = vst [vmem:[%s259] sm:$0xff] %v430
        %435 = vst [vmem:[%s259 + $0x8] sm:$0xff] %v431
        %436 = vst [vmem:[%s259 + $0x10] sm:$0xff] %v432
        %437 = vst [vmem:[%s259 + $0x18] sm:$0xff] %v433
        %s438 = sand.u32 %s141, 1
        %s439 = scalar_lea.sflag [#allocation4], %s438
        %s440 = sand.u32 %s141, 1
        %s441 = smul.addr %s440, 32
        %s442 = scalar_lea.vmem [#allocation5], %s441
        // Predicated region
        $region41: #{tpu_custom_call.1} parent=35 // pred_check
          %p443 = pneg %p151
        $region42: #{tpu_custom_call.1} parent=35 // pred_check_branch
          %445 = sbr.rel (%p443) target = $region44
        $region43: #{tpu_custom_call.1} parent=35 // pred_region
          %s446 = smul.u32 2, %s26
          %s448 = ssub.s32 512, 512
          %449 = vsyncadd %s439, %s448
          %s450 = smul.addr %s25, 4
          %s451 = sadd.s32 %s446, %s450
          %s452 = smul.addr %s451, 128
          %s453 = scalar_lea.hbm %s4, %s452
          %s454 = sshll.u32 %s442, 4
          %s455 = int_to_ptr.vmem [resolvable:$true] %s454
          %460 = dma.vmem_to_hbm [thread:$0]  %s455, 512, %s453, %s439, 256, 256, 16
        $region44: #{tpu_custom_call.1} parent=35 // pred_fallthru
          _
      $region36: #{tpu_custom_call.1} parent=5 // pred_fallthru
        _
      %p461 = scmp.le.s32.totalorder 2, %s16
      // Predicated region
      $region45: #{tpu_custom_call.1} parent=5 // pred_check
        %p462 = pneg %p461
      $region46: #{tpu_custom_call.1} parent=5 // pred_check_branch
        %464 = sbr.rel (%p462) target = $region48
      $region47: #{tpu_custom_call.1} parent=5 // pred_region
        %s465 = ssub.s32 %s16, 2
        // Predicated region
        $region49: #{tpu_custom_call.1} parent=47 // pred_check
          %p466 = pneg %p157
        $region50: #{tpu_custom_call.1} parent=47 // pred_check_branch
          %468 = sbr.rel (%p466) target = $region52
        $region51: #{tpu_custom_call.1} parent=47 // pred_region
          %s469 = sand.u32 %s142, 1
          %s470 = scalar_lea.sflag [#allocation4], %s469
          %s471 = sand.u32 %s142, 1
          %s472 = smul.addr %s471, 32
          %s473 = scalar_lea.vmem [#allocation5], %s472
          %474 = dma.done %s470, 512
        $region52: #{tpu_custom_call.1} parent=47 // pred_fallthru
          _
      $region48: #{tpu_custom_call.1} parent=5 // pred_fallthru
        _
    $region6: #{tpu_custom_call.1} parent=1 // loop_footer
      %s20 = sadd.s32 1, %s16
    $region7: #{tpu_custom_call.1} parent=1 // loop_footer_branch
      %15 = sbr.rel target = $region3
    $region8: #{tpu_custom_call.1} parent=1 // loop_exit
      _
    %475 = vsyncpa [#allocation3], 1
    %s476 = scalar_lea.sflag [#allocation3], 1
    %477 = vsyncpa %s476, 1
    %478 = vsyncpa [#allocation4], 1
    %s479 = scalar_lea.sflag [#allocation4], 1
    %480 = vsyncpa %s479, 1

</llo_original>
